<compile_context>
chip_gen: v6e
topology: v6e:2x2x1
jax: 0.10.0
libtpu: 0.0.40
codegen_flags: <defaults>
</compile_context>

<pallas_src>
import functools

import jax
import jax.numpy as jnp
from jax.experimental import pallas as pl
from jax.experimental.pallas import tpu as pltpu


def _dice_loss_kernel(logits_ref, target_ref, out_ref, *, n_total, tile_n, class_axis):
    """One grid step: partial sum of dsc over `tile_n` samples.

    class_axis=0: block is [C, tile_n]  (samples on lanes; C < 128 path).
    class_axis=1: block is [tile_n, C]  (row-major; C >= 128 path).
    """
    i = pl.program_id(0)
    ca = class_axis
    sa = 1 - class_axis

    x = logits_ref[...]                 # logits block, input dtype
    t = target_ref[...]                 # int32, size 1 along the class axis

    # Numerically stable target-class softmax probability p = e_t / s.
    # max is exact in the input dtype; the subtraction feeding exp is done in
    # f32 so bf16 inputs keep full precision in the exponent argument.
    m = jnp.max(x, axis=ca, keepdims=True).astype(jnp.float32)
    e = jnp.exp(x.astype(jnp.float32) - m)
    s = jnp.sum(e, axis=ca, keepdims=True)

    # Target logit via masking x in the input dtype (a single nonzero per
    # sample, so the sum is exact), then one extra exp on the narrow result.
    cls = jax.lax.broadcasted_iota(jnp.int32, x.shape, ca)
    x_t = jnp.sum(jnp.where(cls == t, x, jnp.zeros_like(x)),
                  axis=ca, keepdims=True).astype(jnp.float32)
    e_t = jnp.exp(x_t - m)

    # dsc = 1 - q/(q+1) = 1/(1+q), q = (1-p)p, p = e_t/s
    #     = s^2 / (s^2 + (s - e_t) * e_t)   -> a single divide, exact algebra.
    s2 = s * s
    dsc = s2 / (s2 + (s - e_t) * e_t)

    # Mask padded samples of a ragged final tile (also kills any inf/nan that
    # exp may have produced from padding garbage).
    sample = i * tile_n + jax.lax.broadcasted_iota(jnp.int32, dsc.shape, sa)
    dsc = jnp.where(sample < n_total, dsc, 0.0)

    # Per-tile partial sum -> lane 0 of this step's (1, 128) output block
    # (unmasked, lane-dense store; zeros elsewhere keep the outside sum exact).
    partial = jnp.sum(dsc)
    lane = jax.lax.broadcasted_iota(jnp.int32, (1, 128), 1)
    out_ref[...] = jnp.where(lane == 0, partial, 0.0)


def _vmem_limit_bytes():
    """Generation-aware VMEM request: leave headroom on 64-MiB (v7x) parts."""
    try:
        cap = int(pltpu.get_tpu_info().vmem_capacity_bytes)
    except Exception:                       # no info -> assume smallest capacity
        cap = 64 * 1024 * 1024
    if cap >= 128 * 1024 * 1024:            # v5e / v6e (128 MiB physical)
        return 96 * 1024 * 1024
    return min(44 * 1024 * 1024, (cap * 3) // 4)   # v7x (64 MiB) or unknown


def _choose_tile(n, c, itemsize, samples_on_lanes, vmem_limit, tile_n=None):
    """Pick tile_n from a VMEM budget (~half the limit): double-buffered input
    blocks + f32 exp temporaries + padded target / epilogue temporaries."""
    budget = vmem_limit // 2
    if samples_on_lanes:                        # block [C, tile_n]
        c_pad = -(-c // 8) * 8                  # sublane padding only
        per_sample = (2 * c_pad * itemsize      # logits block, 2 pipeline bufs
                      + 2 * c_pad * 4           # f32 (x - m) / exp temporaries
                      + 2 * 8 * 4               # (1, tile) int32 target, 2 bufs
                      + 6 * 8 * 4)              # [1, tile] epilogue temporaries
        align, cap = 128, 32768                 # lane-dim tile: multiple of 128
    else:                                       # block [tile_n, C]
        c_pad = -(-c // 128) * 128              # lane padding
        per_sample = (2 * c_pad * itemsize
                      + 2 * c_pad * 4
                      + 2 * 128 * 4             # (tile, 1) int32 target, lane-padded
                      + 6 * 128 * 4)            # [tile, 1] epilogue temporaries
        align, cap = 8, 2048                    # sublane-dim tile: multiple of 8
    if tile_n is None:
        tile_n = budget // per_sample
    tile_n = int(min(tile_n, cap))
    if tile_n >= n:
        return n                                # single full-extent tile is legal
    return max(align, (tile_n // align) * align)


def dice_loss(logits, target, *, tile_n=None):
    """logits: [N, C] float array, target: [N] integer array -> scalar f32."""
    n, c = logits.shape
    itemsize = jnp.dtype(logits.dtype).itemsize
    vmem_limit = _vmem_limit_bytes()

    # Narrow class counts (< 128 lanes): put samples on the lane axis so every
    # vreg lane carries data and the epilogue is lane-dense.  Costs one extra
    # HBM pass for the transpose, which is cheap next to the 128/C lane waste.
    samples_on_lanes = c < 128
    tile = _choose_tile(n, c, itemsize, samples_on_lanes, vmem_limit, tile_n)
    grid = pl.cdiv(n, tile)

    if samples_on_lanes:
        logits_in = logits.T                                   # [C, N]
        target_in = target.astype(jnp.int32).reshape(1, n)     # lane-dense
        in_specs = [pl.BlockSpec((c, tile), lambda i: (0, i)),
                    pl.BlockSpec((1, tile), lambda i: (0, i))]
        class_axis = 0
    else:
        logits_in = logits                                     # [N, C]
        target_in = target.astype(jnp.int32).reshape(n, 1)
        in_specs = [pl.BlockSpec((tile, c), lambda i: (i, 0)),
                    pl.BlockSpec((tile, 1), lambda i: (i, 0))]
        class_axis = 1

    kernel = functools.partial(_dice_loss_kernel, n_total=n, tile_n=tile,
                               class_axis=class_axis)
    partials = pl.pallas_call(
        kernel,
        out_shape=jax.ShapeDtypeStruct((1, 128 * grid), jnp.float32),
        grid=(grid,),
        in_specs=in_specs,
        out_specs=pl.BlockSpec((1, 128), lambda i: (0, i)),
        compiler_params=pltpu.CompilerParams(
            dimension_semantics=("parallel",),
            vmem_limit_bytes=vmem_limit,
        ),
        cost_estimate=pl.CostEstimate(
            flops=6 * n * c + 16 * n,
            transcendentals=n * (c + 1),
            bytes_accessed=n * c * itemsize + n * 4 + 128 * grid * 4,
        ),
    )(logits_in, target_in)

    # Finalize outside the kernel: only lane 0 of each per-tile block is
    # nonzero and padded samples contributed exactly 0, so sum/N is exact.
    return jnp.sum(partials) / jnp.float32(n)


def _dice_loss_ref(logits, target):
    # plain-JAX reference mirroring the PyTorch module
    probs = jax.nn.softmax(logits.astype(jnp.float32), axis=1)
    p = jnp.take_along_axis(probs, target.astype(jnp.int32)[:, None], axis=1)
    q = (1.0 - p) * p
    return jnp.mean(1.0 - q / (q + 1.0))


if __name__ == "__main__":
    key = jax.random.PRNGKey(0)
    k = jax.random.split(key, 8)

    # Case 1: module-spec shape (N=8, C=32), f32, single full-extent tile,
    # samples-on-lanes (C < 128) layout.
    n1, c1 = 8, 32
    logits1 = jax.random.normal(k[0], (n1, c1), dtype=jnp.float32)
    target1 = jax.random.randint(k[1], (n1,), 0, c1, dtype=jnp.int32)
    loss1 = dice_loss(logits1, target1)
    jax.block_until_ready(loss1)
    ref1 = _dice_loss_ref(logits1, target1)
    assert jnp.allclose(loss1, ref1, atol=1e-5, rtol=1e-5), (loss1, ref1)

    # Case 2: multi-tile samples-on-lanes path with a ragged final tile
    # (masking + per-tile partial sums under the "parallel" axis).
    n2, c2 = 200, 64
    logits2 = jax.random.normal(k[2], (n2, c2), dtype=jnp.float32)
    target2 = jax.random.randint(k[3], (n2,), 0, c2, dtype=jnp.int32)
    loss2 = dice_loss(logits2, target2, tile_n=128)     # grid=2, last tile ragged
    jax.block_until_ready(loss2)
    ref2 = _dice_loss_ref(logits2, target2)
    assert jnp.allclose(loss2, ref2, atol=1e-5, rtol=1e-5), (loss2, ref2)

    # Case 3: bf16 logits (exponent argument computed in f32 inside the kernel).
    logits3 = jax.random.normal(k[4], (n2, c2), dtype=jnp.bfloat16)
    target3 = jax.random.randint(k[5], (n2,), 0, c2, dtype=jnp.int32)
    loss3 = dice_loss(logits3, target3, tile_n=128)
    jax.block_until_ready(loss3)
    ref3 = _dice_loss_ref(logits3, target3)
    assert jnp.allclose(loss3, ref3, atol=1e-5, rtol=1e-5), (loss3, ref3)

    # Case 4: wide classes (C >= 128) keep the row-major layout; ragged tiles.
    n4, c4 = 200, 256
    logits4 = jax.random.normal(k[6], (n4, c4), dtype=jnp.float32)
    target4 = jax.random.randint(k[7], (n4,), 0, c4, dtype=jnp.int32)
    loss4 = dice_loss(logits4, target4, tile_n=64)      # grid=4, row-major path
    jax.block_until_ready(loss4)
    ref4 = _dice_loss_ref(logits4, target4)
    assert jnp.allclose(loss4, ref4, atol=1e-5, rtol=1e-5), (loss4, ref4)

    print("KERNEL_OK")
</pallas_src>

<mosaic_0001>
module attributes {stable_mosaic.version = 11 : i64} {
  func.func @_dice_loss_kernel(%arg0: i32, %arg1: memref<32x8xf32, #tpu.memory_space<vmem>>, %arg2: memref<1x8xi32, #tpu.memory_space<vmem>>, %arg3: memref<1x128xf32, #tpu.memory_space<vmem>>) attributes {dimension_semantics = [#tpu.dimension_semantics<parallel>], iteration_bounds = array<i64: 1>, scalar_prefetch = 0 : i64, scratch_operands = 0 : i64, tpu.core_type = #tpu.core_type<tc>, window_params = [{transform_indices = @transform_0, window_bounds = array<i64: 32, 8>}, {transform_indices = @transform_1, window_bounds = array<i64: 1, 8>}, {transform_indices = @transform_2, window_bounds = array<i64: 1, 128>}]} {
    %c0 = arith.constant 0 : index
    %c0_0 = arith.constant 0 : index
    %0 = vector.load %arg1[%c0, %c0_0] : memref<32x8xf32, #tpu.memory_space<vmem>>, vector<32x8xf32>
    %c0_1 = arith.constant 0 : index
    %c0_2 = arith.constant 0 : index
    %1 = vector.load %arg2[%c0_1, %c0_2] : memref<1x8xi32, #tpu.memory_space<vmem>>, vector<1x8xi32>
    %cst = arith.constant dense<0xFF800000> : vector<8xf32>
    %2 = vector.multi_reduction <maximumf>, %0, %cst [0] : vector<32x8xf32> to vector<8xf32>
    %3 = vector.shape_cast %2 : vector<8xf32> to vector<1x8xf32>
    %4 = vector.broadcast %3 : vector<1x8xf32> to vector<32x8xf32>
    %5 = arith.subf %0, %4 : vector<32x8xf32>
    %6 = math.exp %5 : vector<32x8xf32>
    %cst_3 = arith.constant dense<0.000000e+00> : vector<8xf32>
    %7 = vector.multi_reduction <add>, %6, %cst_3 [0] : vector<32x8xf32> to vector<8xf32>
    %8 = vector.shape_cast %7 : vector<8xf32> to vector<1x8xf32>
    %9 = tpu.iota {dimensions = array<i32: 0>} : vector<32x8xi32>
    %10 = vector.broadcast %1 : vector<1x8xi32> to vector<32x8xi32>
    %11 = arith.cmpi eq, %9, %10 : vector<32x8xi32>
    %cst_4 = arith.constant 0.000000e+00 : f32
    %12 = vector.broadcast %cst_4 : f32 to vector<32x8xf32>
    %13 = arith.select %11, %0, %12 : vector<32x8xi1>, vector<32x8xf32>
    %cst_5 = arith.constant dense<0.000000e+00> : vector<8xf32>
    %14 = vector.multi_reduction <add>, %13, %cst_5 [0] : vector<32x8xf32> to vector<8xf32>
    %15 = vector.shape_cast %14 : vector<8xf32> to vector<1x8xf32>
    %16 = arith.subf %15, %3 : vector<1x8xf32>
    %17 = math.exp %16 : vector<1x8xf32>
    %18 = arith.mulf %8, %8 : vector<1x8xf32>
    %19 = arith.subf %8, %17 : vector<1x8xf32>
    %20 = arith.mulf %19, %17 : vector<1x8xf32>
    %21 = arith.addf %18, %20 : vector<1x8xf32>
    %22 = arith.divf %18, %21 : vector<1x8xf32>
    %c8_i32 = arith.constant 8 : i32
    %23 = arith.muli %arg0, %c8_i32 : i32
    %24 = tpu.iota {dimensions = array<i32: 1>} : vector<1x8xi32>
    %25 = vector.broadcast %23 : i32 to vector<1x8xi32>
    %26 = arith.addi %25, %24 : vector<1x8xi32>
    %c8_i32_6 = arith.constant 8 : i32
    %27 = vector.broadcast %c8_i32_6 : i32 to vector<1x8xi32>
    %28 = arith.cmpi slt, %26, %27 : vector<1x8xi32>
    %cst_7 = arith.constant 0.000000e+00 : f32
    %29 = vector.broadcast %cst_7 : f32 to vector<1x8xf32>
    %30 = arith.select %28, %22, %29 : vector<1x8xi1>, vector<1x8xf32>
    %31 = vector.shape_cast %30 : vector<1x8xf32> to vector<1x1x8xf32>
    %cst_8 = arith.constant dense<0.000000e+00> : vector<1xf32>
    %32 = vector.multi_reduction <add>, %31, %cst_8 [1, 2] : vector<1x1x8xf32> to vector<1xf32>
    %33 = vector.shape_cast %32 : vector<1xf32> to vector<1x1x1xf32>
    %34 = vector.extract %33[0, 0, 0] : f32 from vector<1x1x1xf32>
    %35 = tpu.iota {dimensions = array<i32: 1>} : vector<1x128xi32>
    %c0_i32 = arith.constant 0 : i32
    %36 = vector.broadcast %c0_i32 : i32 to vector<1x128xi32>
    %37 = arith.cmpi eq, %35, %36 : vector<1x128xi32>
    %cst_9 = arith.constant 0.000000e+00 : f32
    %38 = vector.broadcast %34 : f32 to vector<1x128xf32>
    %39 = vector.broadcast %cst_9 : f32 to vector<1x128xf32>
    %40 = arith.select %37, %38, %39 : vector<1x128xi1>, vector<1x128xf32>
    %c0_10 = arith.constant 0 : index
    %c0_11 = arith.constant 0 : index
    %41 = vector.load %arg3[%c0_10, %c0_11] : memref<1x128xf32, #tpu.memory_space<vmem>>, vector<1x128xf32>
    tpu.vector_store %arg3[%c0_10, %c0_11], %40 {strides = array<i32>} : memref<1x128xf32, #tpu.memory_space<vmem>>, vector<1x128xf32>,
    return
  }
  func.func @transform_0(%arg0: i32) -> (i32, i32) {
    %c0_i32 = arith.constant 0 : i32
    %c0_i32_0 = arith.constant 0 : i32
    return %c0_i32, %arg0 : i32, i32
  }
  func.func @transform_1(%arg0: i32) -> (i32, i32) {
    %c0_i32 = arith.constant 0 : i32
    %c0_i32_0 = arith.constant 0 : i32
    return %c0_i32, %arg0 : i32, i32
  }
  func.func @transform_2(%arg0: i32) -> (i32, i32) {
    %c0_i32 = arith.constant 0 : i32
    %c0_i32_0 = arith.constant 0 : i32
    return %c0_i32, %arg0 : i32, i32
  }
}

</mosaic_0001>

<llo_original>
// kernel: tpu_custom_call.1
$region0: #{tpu_custom_call.1}
  #allocation0 [shape = 'u32[]', space=smem, size = 0x4, offset = 0x4, fixed_abs, tag = 'smem constant byte address 0x4 - core index']
  #allocation1 [shape = 'u32[144,128]{1,0:T(1,128)}', space=vmem, size = 0x12000, scoped, tag = 'internal scratch']
  %s0 = inlined_call_operand.vmem [shape: f32[32,8], index: 0, kind: input, shape index: {}]
  %s1 = inlined_call_operand.vmem [shape: s32[1,8], index: 1, kind: input, shape index: {}]
  %s2 = inlined_call_operand.hbm [shape: f32[1,128], index: 2, kind: output, shape index: {}]
  %s3 = sld [smem:[#allocation0]]
  $region18: #{tpu_custom_call.1} parent=0
    _
  %s5 = ssub.s32 1, %s3
  %s6 = scalar_select 0, %s5, %s3
  $region1: #{tpu_custom_call.1} parent=0
    #allocation2 [shape = 'u8[512]{0}', space=vmem, size = 0x400, scoped, tag = 'output window, operand 0, single buffered']
    #allocation3 [shape = 's32[1]{0}', space=sflag, size = 0x4, scoped, tag = 'scoped memory for tpu_custom_call.1']
    %7 = vsyncpa [#allocation3], 0
    // Predicated region
    $region2: #{tpu_custom_call.1} parent=1 // pred_check
      _
    $region3: #{tpu_custom_call.1} parent=1 // pred_check_branch
      %9 = sbr.rel (0) target = $region5
    $region4: #{tpu_custom_call.1} parent=1 // pred_region
      _
    $region5: #{tpu_custom_call.1} parent=1 // pred_fallthru
      _
    // Predicated region
    $region6: #{tpu_custom_call.1} parent=1 // pred_check
      _
    $region7: #{tpu_custom_call.1} parent=1 // pred_check_branch
      %11 = sbr.rel (0) target = $region9
    $region8: #{tpu_custom_call.1} parent=1 // pred_region
      _
    $region9: #{tpu_custom_call.1} parent=1 // pred_fallthru
      _
    %v12 = vld [vmem:[%s0] sm:$0xff]
    %v13 = vld [vmem:[%s0 + $0x8] sm:$0xff]
    %v14 = vld [vmem:[%s0 + $0x10] sm:$0xff]
    %v15 = vld [vmem:[%s0 + $0x18] sm:$0xff]
    %v16 = vld [vmem:[%s1] sm:$0x1]
    %vm17 = vcmask 64512
    %v18 = vsel %vm17, %v12, -inf
    %v19 = vsel %vm17, %v13, -inf
    %v20 = vsel %vm17, %v14, -inf
    %v21 = vsel %vm17, %v15, -inf
    %v22 = vmax.f32 %v18, %v19
    %v23 = vmax.f32 %v20, %v21
    %v24 = vmax.f32 %v22, %v23
    %v25 = vrot.slane %v24, 4
    %v26 = vmax.f32 %v24, %v25
    %v27 = vrot.slane %v26, 2
    %v28 = vmax.f32 %v26, %v27
    %v29 = vrot.slane %v28, 1
    %v30 = vmax.f32 %v28, %v29
    %v31 = vsub.f32 %v12, %v30
    %v32 = vsub.f32 %v13, %v30
    %v33 = vsub.f32 %v14, %v30
    %v34 = vsub.f32 %v15, %v30
    %v35 = vmul.f32 %v31, 1.442695
    %v36 = vpow.pop %v35
    %v37 = vmul.f32 %v32, 1.442695
    %v38 = vpow.pop %v37
    %v39 = vmul.f32 %v33, 1.442695
    %v40 = vpow.pop %v39
    %v41 = vmul.f32 %v34, 1.442695
    %v42 = vpow.pop %v41
    %v43 = vsel %vm17, %v36, 0.0
    %v44 = vsel %vm17, %v38, 0.0
    %v45 = vadd.f32 %v43, %v44
    %v46 = vsel %vm17, %v40, 0.0
    %v47 = vadd.f32 %v45, %v46
    %v48 = vsel %vm17, %v42, 0.0
    %v49 = vadd.f32 %v47, %v48
    %v50 = vrot.slane %v49, 4
    %v51 = vadd.f32 %v49, %v50
    %v52 = vrot.slane %v51, 2
    %v53 = vadd.f32 %v51, %v52
    %v54 = vrot.slane %v53, 1
    %v55 = vadd.f32 %v53, %v54
    %v56 = vlaneseq
    %v57 = vshrl.u32 %v56, 7
    %v58 = vadd.s32 %v57, 8
    %v59 = vadd.s32 %v57, 16
    %v60 = vadd.s32 %v57, 24
    %v61 = vlaneseq
    %v62 = vshrl.u32 %v61, 7
    %v63 = vsub.s32 0, %v62
    %v64 = vrot.slane %v16, %v63
    %vm65 = vcmp.eq.s32.totalorder %v57, %v64
    %vm66 = vcmp.eq.s32.totalorder %v58, %v64
    %vm67 = vcmp.eq.s32.totalorder %v59, %v64
    %vm68 = vcmp.eq.s32.totalorder %v60, %v64
    %v69 = vsel %vm65, %v12, 0.0
    %v70 = vsel %vm66, %v13, 0.0
    %v71 = vsel %vm67, %v14, 0.0
    %v72 = vsel %vm68, %v15, 0.0
    %v73 = vsel %vm17, %v69, 0.0
    %v74 = vsel %vm17, %v70, 0.0
    %v75 = vadd.f32 %v73, %v74
    %v76 = vsel %vm17, %v71, 0.0
    %v77 = vadd.f32 %v75, %v76
    %v78 = vsel %vm17, %v72, 0.0
    %v79 = vadd.f32 %v77, %v78
    %v80 = vrot.slane %v79, 4
    %v81 = vadd.f32 %v79, %v80
    %v82 = vrot.slane %v81, 2
    %v83 = vadd.f32 %v81, %v82
    %v84 = vrot.slane %v83, 1
    %v85 = vadd.f32 %v83, %v84
    %v86 = vsub.f32 %v85, %v30
    %v87 = vmul.f32 %v86, 1.442695
    %v88 = vpow.pop %v87
    %v89 = vmul.f32 %v55, %v55
    %v90 = vsub.f32 %v55, %v88
    %v91 = vmul.f32 %v90, %v88
    %v92 = vadd.f32 %v89, %v91
    %v93 = vrcp.pop %v92
    %v94 = vmul.f32 %v89, %v93
    %s95 = smul.u32 0, 8
    %v96 = vlaneseq
    %v97 = vand.u32 %v96, 127
    %v98 = vstv %s95
    %v99 = vadd.s32 %v98, %v97
    %vm100 = vcmp.lt.s32.totalorder %v99, 8
    %v101 = vsel %vm100, %v94, 0.0
    %vm102 = vcmask 57344
    %v103 = vsel %vm102, %v101, 0.0
    %104 = vadd.xlane.f32.xlu0 %v103
    %v105 = vpop.xlane.xlu0 %104
    %v106 = vrot.slane %v105, 4
    %v107 = vadd.f32 %v105, %v106
    %v108 = vrot.slane %v107, 2
    %v109 = vadd.f32 %v107, %v108
    %v110 = vrot.slane %v109, 1
    %v111 = vadd.f32 %v109, %v110
    %s112 = vtos %v111
    %vm113 = vcmp.eq.s32.totalorder %v97, 0
    %v114 = vstv %s112
    %v115 = vsel %vm113, %v114, 0.0
    %116 = vst [vmem:[#allocation2] sm:$0x1] %v115
    // Predicated region
    $region10: #{tpu_custom_call.1} parent=1 // pred_check
      _
    $region11: #{tpu_custom_call.1} parent=1 // pred_check_branch
      %118 = sbr.rel (0) target = $region13
    $region12: #{tpu_custom_call.1} parent=1 // pred_region
      %s120 = ssub.s32 16, 16
      %121 = vsyncadd [#allocation3], %s120
      %s123 = sshll.u32 [#allocation2], 4
      %s124 = int_to_ptr.vmem [resolvable:$true] %s123
      %126 = dma.vmem_to_hbm [thread:$0]  %s124, 16, %s2, [#allocation3]
    $region13: #{tpu_custom_call.1} parent=1 // pred_fallthru
      _
    // Predicated region
    $region14: #{tpu_custom_call.1} parent=1 // pred_check
      _
    $region15: #{tpu_custom_call.1} parent=1 // pred_check_branch
      %128 = sbr.rel (0) target = $region17
    $region16: #{tpu_custom_call.1} parent=1 // pred_region
      %129 = dma.done [#allocation3], 16
    $region17: #{tpu_custom_call.1} parent=1 // pred_fallthru
      _
    %130 = vsyncpa [#allocation3], 1

</llo_original>
